<compile_context>
chip_gen: v5e
topology: v5e:2x2
jax: 0.10.0
libtpu: 0.0.40
codegen_flags: <defaults>
</compile_context>

<pallas_src>
import functools

import jax
import jax.numpy as jnp
from jax.experimental import pallas as pl
from jax.experimental.pallas import tpu as pltpu


# ------------------------- parameter / buffer setup -------------------------

def construct_grid(grid_range, grid_shape):
    """Equivalent of tnp construct_grid: meshgrid of linspaces, dims stacked last."""
    axes = [
        jnp.linspace(lo, hi, num=num, dtype=jnp.float32)
        for (lo, hi), num in zip(grid_range, grid_shape)
    ]
    mesh = jnp.meshgrid(*axes, indexing="ij")
    return jnp.stack(mesh, axis=-1)  # grid_shape + (dims,)


def make_lengthscale(dims, init_lengthscale=0.1):
    """Deterministic init mirroring BaseSetConv.__init__ + lengthscale property."""
    init = jnp.full((dims,), init_lengthscale, dtype=jnp.float32)
    param = jnp.log(jnp.exp(init) - 1.0)          # softplus inverse
    return 1e-5 + jax.nn.softplus(param)          # 1e-5 + softplus(param)


def _mxu_depth_target():
    """MXU contraction-depth target: 128 on v5e, 256 on v6e/v7x (best effort)."""
    try:
        kind = jax.devices()[0].device_kind.lower()
        if "v5e" in kind or "v5 lite" in kind or "v5litepod" in kind:
            return 128
    except Exception:
        pass
    return 256


# ------------------------------ Pallas kernel -------------------------------

def _setconv_kernel(nhil_ref, gT_ref, xrows_ref, zbd_ref, out_ref, *, dx):
    # nhil_ref  : SMEM [dx]            -0.5 / lengthscale^2 (scalar reads)
    # gT_ref    : VMEM [dx, G]         grid transposed -> G in lanes (shared)
    # xrows_ref : VMEM [R, dx]         this block's context inputs, R = bm*n_pad
    # zbd_ref   : VMEM [1, bm*dz, R]   block-diagonal z^T for this block
    # out_ref   : VMEM [1, bm*dz, G]   lane-dense gridded output slab (transposed)
    xr = xrows_ref[...]                                   # [R, dx]

    # pre[r, g] = sum_d (-0.5/ls_d^2) * (x[r, d] - grid[g, d])^2   -> [R, G]
    pre = None
    for d in range(dx):                                   # dx tiny (e.g. 2): unrolled VPU work
        diff = xr[:, d:d + 1] - gT_ref[d:d + 1, :]        # [R, 1] - [1, G] -> [R, G]
        term = (diff * diff) * nhil_ref[d]                # scalar from SMEM (sign folded in)
        pre = term if pre is None else pre + term

    weights = jnp.exp(pre)                                # [R, G] one EUP pass

    # One MXU contraction per step: [bm*dz, R] @ [R, G] -> [bm*dz, G]
    out_ref[0] = jnp.dot(zbd_ref[0], weights, preferred_element_type=jnp.float32)


# --------------------------------- wrapper ----------------------------------

@jax.jit
def setconv_grid_encoder_forward(x, z, grid, lengthscale):
    """Pallas implementation of SetConvGridEncoder.forward (use_nn=False)."""
    m, n, dx = x.shape
    dz = z.shape[-1]
    grid_spatial = grid.shape[:-1]
    grid_flat = grid.reshape(-1, dx)                       # [G, dx]
    G = grid_flat.shape[0]

    # Batch-invariant precompute: grid transposed (G in lanes), folded scale.
    gT = jnp.transpose(grid_flat).astype(jnp.float32)      # [dx, G]
    ls = lengthscale.astype(jnp.float32).reshape(dx)
    neg_half_inv_ls2 = -0.5 / (ls * ls)                    # [dx]

    xf = x.astype(jnp.float32)                             # [m, n, dx]
    zf = z.astype(jnp.float32)                             # [m, n, dz]

    # Pad n to a multiple of 8 (sublane-dense rows). Padded rows have z == 0,
    # so their (nonzero) weights multiply zero columns of z_bd -> no effect.
    n_pad = -(-n // 8) * 8
    if n_pad != n:
        xf = jnp.pad(xf, ((0, 0), (0, n_pad - n), (0, 0)))
        zf = jnp.pad(zf, ((0, 0), (0, n_pad - n), (0, 0)))

    # Batch block size: fill the MXU contraction depth, but keep >=2 grid
    # blocks (v7x megacore) when the batch allows it.
    depth = _mxu_depth_target()
    bm = max(1, min(m, depth // n_pad))
    if m >= 2:
        bm = min(bm, -(-m // 2))
    num_blocks = -(-m // bm)
    m_pad = num_blocks * bm
    if m_pad != m:
        xf = jnp.pad(xf, ((0, m_pad - m), (0, 0), (0, 0)))
        zf = jnp.pad(zf, ((0, m_pad - m), (0, 0), (0, 0)))

    R = bm * n_pad

    # Flattened x rows (wrapper-side reshape -> no in-kernel relayout).
    x_rows = xf.reshape(m_pad * n_pad, dx)                 # [m_pad*n_pad, dx]

    # Block-diagonal z^T per batch block: [num_blocks, bm*dz, bm*n_pad].
    zT = jnp.swapaxes(zf, 1, 2).reshape(num_blocks, bm, dz, n_pad)
    eye = jnp.eye(bm, dtype=jnp.float32)
    z_bd = (zT[:, :, :, None, :] * eye[None, :, None, :, None]).reshape(
        num_blocks, bm * dz, R)

    kernel = functools.partial(_setconv_kernel, dx=dx)

    out = pl.pallas_call(
        kernel,
        out_shape=jax.ShapeDtypeStruct((num_blocks, bm * dz, G), jnp.float32),
        grid=(num_blocks,),
        in_specs=[
            pl.BlockSpec(memory_space=pltpu.MemorySpace.SMEM),   # -0.5/ls^2 scalars
            pl.BlockSpec((dx, G), lambda i: (0, 0)),             # grid^T, shared
            pl.BlockSpec((R, dx), lambda i: (i, 0)),             # x rows for this block
            pl.BlockSpec((1, bm * dz, R), lambda i: (i, 0, 0)),  # block-diagonal z^T
        ],
        out_specs=pl.BlockSpec((1, bm * dz, G), lambda i: (i, 0, 0)),
        compiler_params=pltpu.CompilerParams(
            dimension_semantics=("parallel",)),
    )(neg_half_inv_ls2, gT, x_rows, z_bd)

    # Undo the transposed/padded layout outside the kernel.
    z_grid_T = out.reshape(m_pad, dz, G)[:m]                     # [m, dz, G]
    z_grid = jnp.swapaxes(z_grid_T, 1, 2).reshape((m,) + grid_spatial + (dz,))
    # x_grid = einops.repeat(grid, '... d -> b ... d')
    x_grid = jnp.broadcast_to(grid[None], (m,) + grid.shape)
    return x_grid, z_grid

# TODO(synk): use_nn=True path (setconv_to_grid_nn nearest-neighbour scatter) not implemented.


# ------------------------------- reference ----------------------------------

def _reference_forward(x, z, grid, lengthscale):
    m = x.shape[0]
    dx = x.shape[-1]
    grid_flat = grid.reshape(-1, dx)                              # [G, dx]
    x_grid_flat = jnp.broadcast_to(grid_flat[None], (m,) + grid_flat.shape)
    dists2 = (x_grid_flat[:, :, None, :] - x[:, None, :, :]) ** 2
    pre_exp = jnp.sum(dists2 / (lengthscale ** 2), axis=-1)       # [m, G, n]
    weights = jnp.exp(-0.5 * pre_exp)
    z_grid_flat = weights @ z                                     # [m, G, dz]
    x_grid = jnp.broadcast_to(grid[None], (m,) + grid.shape)
    z_grid = z_grid_flat.reshape((m,) + grid.shape[:-1] + (z.shape[-1],))
    return x_grid, z_grid


# ----------------------------------- main ------------------------------------

if __name__ == "__main__":
    # Module config: dims=2, grid_range=((-1,1),(-1,1)), grid_shape=(16,16)
    dims = 2
    grid_range = ((-1.0, 1.0), (-1.0, 1.0))
    grid_shape = (16, 16)
    grid = construct_grid(grid_range, grid_shape)                 # [16, 16, 2]
    lengthscale = make_lengthscale(dims, init_lengthscale=0.1)    # [2]

    # Small deterministic inputs consistent with forward: x [m,n,dx], z [m,n,dz]
    m, n, dz = 2, 8, 4
    key = jax.random.PRNGKey(0)
    kx, kz = jax.random.split(key)
    x = jax.random.normal(kx, (m, n, dims), dtype=jnp.float32) * 0.5
    z = jax.random.normal(kz, (m, n, dz), dtype=jnp.float32)

    x_grid, z_grid = setconv_grid_encoder_forward(x, z, grid, lengthscale)
    jax.block_until_ready((x_grid, z_grid))

    x_grid_ref, z_grid_ref = _reference_forward(x, z, grid, lengthscale)
    assert x_grid.shape == (m, 16, 16, dims)
    assert z_grid.shape == (m, 16, 16, dz)
    assert jnp.allclose(x_grid, x_grid_ref, atol=1e-5, rtol=1e-5)
    assert jnp.allclose(z_grid, z_grid_ref, atol=1e-4, rtol=1e-4)

    print("KERNEL_OK")
</pallas_src>

<mosaic_0001>
module attributes {stable_mosaic.version = 11 : i64} {
  func.func @_setconv_kernel(%arg0: i32, %arg1: memref<2xf32, #tpu.memory_space<smem>>, %arg2: memref<2x256xf32, #tpu.memory_space<vmem>>, %arg3: memref<8x2xf32, #tpu.memory_space<vmem>>, %arg4: memref<1x4x8xf32, #tpu.memory_space<vmem>>, %arg5: memref<1x4x256xf32, #tpu.memory_space<vmem>>) attributes {dimension_semantics = [#tpu.dimension_semantics<parallel>], iteration_bounds = array<i64: 2>, scalar_prefetch = 0 : i64, scratch_operands = 0 : i64, tpu.core_type = #tpu.core_type<tc>, window_params = [{transform_indices = @transform_0, window_bounds = array<i64: 2>}, {pipeline_mode = #tpu.pipeline_mode<synchronous>, transform_indices = @transform_1, window_bounds = array<i64: 2, 256>}, {transform_indices = @transform_2, window_bounds = array<i64: 8, 2>}, {transform_indices = @transform_3, window_bounds = array<i64: 1, 4, 8>}, {transform_indices = @transform_4, window_bounds = array<i64: 1, 4, 256>}]} {
    %c0 = arith.constant 0 : index
    %c0_0 = arith.constant 0 : index
    %0 = vector.load %arg3[%c0, %c0_0] : memref<8x2xf32, #tpu.memory_space<vmem>>, vector<8x2xf32>
    %1 = vector.extract_strided_slice %0 {offsets = [0, 0], sizes = [8, 1], strides = [1, 1]} : vector<8x2xf32> to vector<8x1xf32>
    %c0_1 = arith.constant 0 : index
    %c0_2 = arith.constant 0 : index
    %2 = vector.load %arg2[%c0_1, %c0_2] : memref<2x256xf32, #tpu.memory_space<vmem>>, vector<1x256xf32>
    %3 = vector.broadcast %1 : vector<8x1xf32> to vector<8x256xf32>
    %4 = vector.broadcast %2 : vector<1x256xf32> to vector<8x256xf32>
    %5 = arith.subf %3, %4 : vector<8x256xf32>
    %6 = arith.mulf %5, %5 : vector<8x256xf32>
    %c0_3 = arith.constant 0 : index
    %7 = memref.load %arg1[%c0_3] : memref<2xf32, #tpu.memory_space<smem>>
    %8 = vector.broadcast %7 : f32 to vector<8x256xf32>
    %9 = arith.mulf %6, %8 : vector<8x256xf32>
    %10 = vector.extract_strided_slice %0 {offsets = [0, 1], sizes = [8, 1], strides = [1, 1]} : vector<8x2xf32> to vector<8x1xf32>
    %c1 = arith.constant 1 : index
    %c0_4 = arith.constant 0 : index
    %11 = vector.load %arg2[%c1, %c0_4] : memref<2x256xf32, #tpu.memory_space<vmem>>, vector<1x256xf32>
    %12 = vector.broadcast %10 : vector<8x1xf32> to vector<8x256xf32>
    %13 = vector.broadcast %11 : vector<1x256xf32> to vector<8x256xf32>
    %14 = arith.subf %12, %13 : vector<8x256xf32>
    %15 = arith.mulf %14, %14 : vector<8x256xf32>
    %c1_5 = arith.constant 1 : index
    %16 = memref.load %arg1[%c1_5] : memref<2xf32, #tpu.memory_space<smem>>
    %17 = vector.broadcast %16 : f32 to vector<8x256xf32>
    %18 = arith.mulf %15, %17 : vector<8x256xf32>
    %19 = arith.addf %9, %18 : vector<8x256xf32>
    %20 = math.exp %19 : vector<8x256xf32>
    %c0_6 = arith.constant 0 : index
    %c0_7 = arith.constant 0 : index
    %c0_8 = arith.constant 0 : index
    %21 = vector.load %arg4[%c0_6, %c0_7, %c0_8] : memref<1x4x8xf32, #tpu.memory_space<vmem>>, vector<1x4x8xf32>
    %22 = vector.shape_cast %21 : vector<1x4x8xf32> to vector<4x8xf32>
    %cst = arith.constant dense<0.000000e+00> : vector<4x256xf32>
    %23 = tpu.matmul %22, %20, %cst {dimension_numbers = #tpu.dot_dimension_numbers<[1], [0], [0], [1], [0, 0, 1, 1], [], []>} : vector<4x8xf32>, vector<8x256xf32>, vector<4x256xf32> -> vector<4x256xf32>
    %c0_9 = arith.constant 0 : index
    %c0_10 = arith.constant 0 : index
    %c0_11 = arith.constant 0 : index
    %24 = vector.load %arg5[%c0_9, %c0_10, %c0_11] : memref<1x4x256xf32, #tpu.memory_space<vmem>>, vector<1x4x256xf32>
    %25 = vector.shape_cast %24 : vector<1x4x256xf32> to vector<4x256xf32>
    %26 = vector.shape_cast %23 : vector<4x256xf32> to vector<1x4x256xf32>
    tpu.vector_store %arg5[%c0_9, %c0_10, %c0_11], %26 {strides = array<i32>} : memref<1x4x256xf32, #tpu.memory_space<vmem>>, vector<1x4x256xf32>,
    return
  }
  func.func @transform_0(%arg0: i32) -> i32 {
    %c0_i32 = arith.constant 0 : i32
    %c0_i32_0 = arith.constant 0 : i32
    return %c0_i32 : i32
  }
  func.func @transform_1(%arg0: i32) -> (i32, i32) {
    %c0_i32 = arith.constant 0 : i32
    %c0_i32_0 = arith.constant 0 : i32
    %c0_i32_1 = arith.constant 0 : i32
    return %c0_i32, %c0_i32_0 : i32, i32
  }
  func.func @transform_2(%arg0: i32) -> (i32, i32) {
    %c0_i32 = arith.constant 0 : i32
    %c0_i32_0 = arith.constant 0 : i32
    return %arg0, %c0_i32 : i32, i32
  }
  func.func @transform_3(%arg0: i32) -> (i32, i32, i32) {
    %c0_i32 = arith.constant 0 : i32
    %c0_i32_0 = arith.constant 0 : i32
    %c0_i32_1 = arith.constant 0 : i32
    return %arg0, %c0_i32, %c0_i32_0 : i32, i32, i32
  }
  func.func @transform_4(%arg0: i32) -> (i32, i32, i32) {
    %c0_i32 = arith.constant 0 : i32
    %c0_i32_0 = arith.constant 0 : i32
    %c0_i32_1 = arith.constant 0 : i32
    return %arg0, %c0_i32, %c0_i32_0 : i32, i32, i32
  }
}

</mosaic_0001>

<llo_original>
// kernel: setconv_grid_encoder_forward.1
$region0: #{setconv_grid_encoder_forward.1}
  #allocation0 [shape = 'u32[]', space=smem, size = 0x4, offset = 0x4, fixed_abs, tag = 'smem constant byte address 0x4 - core index']
  #allocation1 [shape = 'u32[72,128]{1,0:T(1,128)}', space=vmem, size = 0x9000, scoped, tag = 'internal scratch']
  %s0 = inlined_call_operand.vmem [shape: f32[2], index: 0, kind: input, shape index: {}]
  %s1 = inlined_call_operand.vmem [shape: f32[2,256], index: 1, kind: input, shape index: {}]
  %s2 = inlined_call_operand.vmem [shape: f32[16,2], index: 2, kind: input, shape index: {}]
  %s3 = inlined_call_operand.vmem [shape: f32[2,4,8], index: 3, kind: input, shape index: {}]
  %s4 = inlined_call_operand.vmem [shape: f32[2,4,256], index: 4, kind: output, shape index: {}]
  %s5 = sld [smem:[#allocation0]]
  $region53: #{setconv_grid_encoder_forward.1} parent=0
    _
  %s7 = ssub.s32 1, %s5
  %s8 = scalar_select 0, %s7, %s5
  $region1: #{setconv_grid_encoder_forward.1} parent=0
    #allocation2 [shape = 'u8[512]{0}', space=smem, size = 0x200, scoped, tag = 'input window, operand 0, single buffered']
    #allocation3 [shape = 's32[2]{0}', space=sflag, size = 0x8, scoped, tag = 'scoped memory for setconv_grid_encoder_forward.1']
    %9 = vsyncpa [#allocation3], 0
    loop: start=0, step=1, limit=4
    $region2: #{setconv_grid_encoder_forward.1} parent=1 // loop_pre_header
      _
    $region3: #{setconv_grid_encoder_forward.1} parent=1 // loop_header
      %s11 = sphi 0, %s15
      %p12 = scmp.ge.s32.totalorder %s11, 4
      %s19 = sphi 0, %s19
      %s21 = sphi 0, %s19
      %s22 = sphi 0, %s21
      %s36 = sphi 0, %s22
      %s40 = sphi 0, %s40
      %s42 = sphi 0, %s40
      %s43 = sphi 0, %s42
      %s57 = sphi 0, %s43
      %s63 = sphi 0, %s65
      %s66 = sphi 0, %s63
      %s67 = sphi 0, %s66
      %s83 = sphi 0, %s67
      %s89 = sphi 0, %s91
      %s92 = sphi 0, %s89
      %s93 = sphi 0, %s92
      %s109 = sphi 0, %s93
      %s115 = sphi 0, %s117
      %s118 = sphi 0, %s115
      %s119 = sphi 0, %s118
      %s135 = sphi 0, %s119
    $region4: #{setconv_grid_encoder_forward.1} parent=1 // loop_header_branch
      %14 = sbr.rel (%p12) target = $region8
    $region5: #{setconv_grid_encoder_forward.1} parent=1 // loop_body
      %s16 = ssub.s32 %s11, 1
      %s17 = ssub.s32 %s11, 2
      %s18 = sadd.s32 %s11, 1
      %s20 = sadd.s32 %s19, 1
      %p23 = scmp.eq.s32.totalorder %s11, 1
      %p24 = scmp.ne.s32.totalorder %s19, %s21
      %p25 = scmp.eq.s32.totalorder %s11, 0
      %p26 = por %p24, %p25
      %p27 = scmp.ne.s32.totalorder %s19, %s21
      %p28 = scmp.eq.s32.totalorder %s16, 1
      %p29 = por %p27, %p28
      %p30 = scmp.ne.s32.totalorder %s21, %s22
      %p31 = scmp.eq.s32.totalorder %s16, 0
      %p32 = por %p30, %p31
      %p33 = scmp.ne.s32.totalorder %s21, %s22
      %p34 = scmp.eq.s32.totalorder %s17, 1
      %p35 = por %p33, %p34
      %p37 = scmp.ne.s32.totalorder %s22, %s36
      %p38 = scmp.eq.s32.totalorder %s17, 0
      %p39 = por %p37, %p38
      %s41 = sadd.s32 %s40, 1
      %p44 = scmp.eq.s32.totalorder %s11, 1
      %p45 = scmp.ne.s32.totalorder %s40, %s42
      %p46 = scmp.eq.s32.totalorder %s11, 0
      %p47 = por %p45, %p46
      %p48 = scmp.ne.s32.totalorder %s40, %s42
      %p49 = scmp.eq.s32.totalorder %s16, 1
      %p50 = por %p48, %p49
      %p51 = scmp.ne.s32.totalorder %s42, %s43
      %p52 = scmp.eq.s32.totalorder %s16, 0
      %p53 = por %p51, %p52
      %p54 = scmp.ne.s32.totalorder %s42, %s43
      %p55 = scmp.eq.s32.totalorder %s17, 1
      %p56 = por %p54, %p55
      %p58 = scmp.ne.s32.totalorder %s43, %s57
      %p59 = scmp.eq.s32.totalorder %s17, 0
      %p60 = por %p58, %p59
      %s61 = ssub.s32 %s11, %s18
      %p62 = scmp.eq.s32.totalorder %s61, 0
      %s64 = sadd.s32 %s63, 1
      %s65 = scalar_select %p62, %s63, %s64
      %p68 = pneg %p62
      %p69 = scmp.eq.s32.totalorder %s11, 1
      %p70 = por %p68, %p69
      %p71 = scmp.ne.s32.totalorder %s63, %s66
      %p72 = scmp.eq.s32.totalorder %s11, 0
      %p73 = por %p71, %p72
      %p74 = scmp.ne.s32.totalorder %s63, %s66
      %p75 = scmp.eq.s32.totalorder %s16, 1
      %p76 = por %p74, %p75
      %p77 = scmp.ne.s32.totalorder %s66, %s67
      %p78 = scmp.eq.s32.totalorder %s16, 0
      %p79 = por %p77, %p78
      %p80 = scmp.ne.s32.totalorder %s66, %s67
      %p81 = scmp.eq.s32.totalorder %s17, 1
      %p82 = por %p80, %p81
      %p84 = scmp.ne.s32.totalorder %s67, %s83
      %p85 = scmp.eq.s32.totalorder %s17, 0
      %p86 = por %p84, %p85
      %s87 = ssub.s32 %s11, %s18
      %p88 = scmp.eq.s32.totalorder %s87, 0
      %s90 = sadd.s32 %s89, 1
      %s91 = scalar_select %p88, %s89, %s90
      %p94 = pneg %p88
      %p95 = scmp.eq.s32.totalorder %s11, 1
      %p96 = por %p94, %p95
      %p97 = scmp.ne.s32.totalorder %s89, %s92
      %p98 = scmp.eq.s32.totalorder %s11, 0
      %p99 = por %p97, %p98
      %p100 = scmp.ne.s32.totalorder %s89, %s92
      %p101 = scmp.eq.s32.totalorder %s16, 1
      %p102 = por %p100, %p101
      %p103 = scmp.ne.s32.totalorder %s92, %s93
      %p104 = scmp.eq.s32.totalorder %s16, 0
      %p105 = por %p103, %p104
      %p106 = scmp.ne.s32.totalorder %s92, %s93
      %p107 = scmp.eq.s32.totalorder %s17, 1
      %p108 = por %p106, %p107
      %p110 = scmp.ne.s32.totalorder %s93, %s109
      %p111 = scmp.eq.s32.totalorder %s17, 0
      %p112 = por %p110, %p111
      %s113 = ssub.s32 %s11, %s18
      %p114 = scmp.eq.s32.totalorder %s113, 0
      %s116 = sadd.s32 %s115, 1
      %s117 = scalar_select %p114, %s115, %s116
      %p120 = pneg %p114
      %p121 = scmp.eq.s32.totalorder %s11, 1
      %p122 = por %p120, %p121
      %p123 = scmp.ne.s32.totalorder %s115, %s118
      %p124 = scmp.eq.s32.totalorder %s11, 0
      %p125 = por %p123, %p124
      %p126 = scmp.ne.s32.totalorder %s115, %s118
      %p127 = scmp.eq.s32.totalorder %s16, 1
      %p128 = por %p126, %p127
      %p129 = scmp.ne.s32.totalorder %s118, %s119
      %p130 = scmp.eq.s32.totalorder %s16, 0
      %p131 = por %p129, %p130
      %p132 = scmp.ne.s32.totalorder %s118, %s119
      %p133 = scmp.eq.s32.totalorder %s17, 1
      %p134 = por %p132, %p133
      %p136 = scmp.ne.s32.totalorder %s119, %s135
      %p137 = scmp.eq.s32.totalorder %s17, 0
      %p138 = por %p136, %p137
      %p139 = scmp.le.s32.totalorder 1, %s11
      %p140 = scmp.lt.s32.totalorder %s11, 3
      %p141 = pnand %p139, %p140
      %p142 = pneg %p141
      // Predicated region
      $region9: #{setconv_grid_encoder_forward.1} parent=5 // pred_check
        _
      $region10: #{setconv_grid_encoder_forward.1} parent=5 // pred_check_branch
        %144 = sbr.rel (%p141) target = $region12
      $region11: #{setconv_grid_encoder_forward.1} parent=5 // pred_region
        %s145 = ssub.s32 %s11, 1
        // Predicated region
        $region13: #{setconv_grid_encoder_forward.1} parent=11 // pred_check
          %p146 = pneg %p32
        $region14: #{setconv_grid_encoder_forward.1} parent=11 // pred_check_branch
          %148 = sbr.rel (%p146) target = $region16
        $region15: #{setconv_grid_encoder_forward.1} parent=11 // pred_region
          %150 = vsyncadd [#allocation3], 0
          %s152 = sshll.u32 %s0, 4
          %s153 = int_to_ptr.vmem [resolvable:$true] %s152
          %155 = dma.vmem_to_smem %s153, 16, [#allocation2], [#allocation3]
        $region16: #{setconv_grid_encoder_forward.1} parent=11 // pred_fallthru
          _
        // Predicated region
        $region17: #{setconv_grid_encoder_forward.1} parent=11 // pred_check
          %p156 = pneg %p53
        $region18: #{setconv_grid_encoder_forward.1} parent=11 // pred_check_branch
          %158 = sbr.rel (%p156) target = $region20
        $region19: #{setconv_grid_encoder_forward.1} parent=11 // pred_region
          _
        $region20: #{setconv_grid_encoder_forward.1} parent=11 // pred_fallthru
          _
      $region12: #{setconv_grid_encoder_forward.1} parent=5 // pred_fallthru
        _
      %p159 = scmp.lt.s32.totalorder %s11, 2
      // Predicated region
      $region21: #{setconv_grid_encoder_forward.1} parent=5 // pred_check
        %p160 = pneg %p159
      $region22: #{setconv_grid_encoder_forward.1} parent=5 // pred_check_branch
        %162 = sbr.rel (%p160) target = $region24
      $region23: #{setconv_grid_encoder_forward.1} parent=5 // pred_region
        // Predicated region
        $region25: #{setconv_grid_encoder_forward.1} parent=23 // pred_check
          %p163 = pneg %p73
        $region26: #{setconv_grid_encoder_forward.1} parent=23 // pred_check_branch
          %165 = sbr.rel (%p163) target = $region28
        $region27: #{setconv_grid_encoder_forward.1} parent=23 // pred_region
          %p166 = scmp.lt.s32.totalorder %s11, 1
          %s167 = scalar_select %p166, %s11, 1
          %s168 = smul.addr %s167, 8
          %s169 = scalar_lea.vmem %s2, %s168
        $region28: #{setconv_grid_encoder_forward.1} parent=23 // pred_fallthru
          _
        // Predicated region
        $region29: #{setconv_grid_encoder_forward.1} parent=23 // pred_check
          %p170 = pneg %p99
        $region30: #{setconv_grid_encoder_forward.1} parent=23 // pred_check_branch
          %172 = sbr.rel (%p170) target = $region32
        $region31: #{setconv_grid_encoder_forward.1} parent=23 // pred_region
          %p173 = scmp.lt.s32.totalorder %s11, 1
          %s174 = scalar_select %p173, %s11, 1
          %s175 = smul.addr %s174, 4
          %s176 = scalar_lea.vmem %s3, %s175
        $region32: #{setconv_grid_encoder_forward.1} parent=23 // pred_fallthru
          _
      $region24: #{setconv_grid_encoder_forward.1} parent=5 // pred_fallthru
        _
      %p177 = scmp.le.s32.totalorder 1, %s11
      %p178 = scmp.lt.s32.totalorder %s11, 3
      %p179 = pnand %p177, %p178
      %p180 = pneg %p179
      // Predicated region
      $region33: #{setconv_grid_encoder_forward.1} parent=5 // pred_check
        _
      $region34: #{setconv_grid_encoder_forward.1} parent=5 // pred_check_branch
        %182 = sbr.rel (%p179) target = $region36
      $region35: #{setconv_grid_encoder_forward.1} parent=5 // pred_region
        %s183 = ssub.s32 %s11, 1
        // Predicated region
        $region37: #{setconv_grid_encoder_forward.1} parent=35 // pred_check
          %p184 = pneg %p32
        $region38: #{setconv_grid_encoder_forward.1} parent=35 // pred_check_branch
          %186 = sbr.rel (%p184) target = $region40
        $region39: #{setconv_grid_encoder_forward.1} parent=35 // pred_region
          %188 = dma.done [#allocation3], 16
        $region40: #{setconv_grid_encoder_forward.1} parent=35 // pred_fallthru
          _
        %189 = sfence
        %p190 = pneg %p32
        %p191 = pneg %p29
        %p192 = pneg %p53
        %p193 = pneg %p50
        %p194 = scmp.lt.s32.totalorder %s16, 1
        %s195 = scalar_select %p194, %s16, 1
        %s196 = smul.addr %s195, 8
        %s197 = scalar_lea.vmem %s2, %s196
        %p198 = pneg %p79
        %p199 = pneg %p76
        %p200 = scmp.lt.s32.totalorder %s16, 1
        %s201 = scalar_select %p200, %s16, 1
        %s202 = smul.addr %s201, 4
        %s203 = scalar_lea.vmem %s3, %s202
        %p204 = pneg %p105
        %p205 = pneg %p102
        %p206 = pneg %p131
        %p207 = pneg %p128
        %p208 = scmp.lt.s32.totalorder %s16, 1
        %s209 = scalar_select %p208, %s16, 1
        %s210 = smul.addr %s209, 2
        %s211 = smul.addr %s210, 4
        %s212 = scalar_lea.vmem %s4, %s211
        %p213 = scmp.lt.s32.totalorder %s16, 1
        %s214 = scalar_select %p213, %s16, 1
        %s215 = smul.addr %s214, 8
        %s216 = scalar_lea.vmem %s2, %s215
        %p217 = scmp.lt.s32.totalorder %s16, 1
        %s218 = scalar_select %p217, %s16, 1
        %s219 = smul.addr %s218, 4
        %s220 = scalar_lea.vmem %s3, %s219
        %p221 = scmp.lt.s32.totalorder %s16, 1
        %s222 = scalar_select %p221, %s16, 1
        %s223 = smul.addr %s222, 2
        %s224 = smul.addr %s223, 4
        %s225 = scalar_lea.vmem %s4, %s224
        %v226 = vld [vmem:[%s216] sm:$0xff]
        %v227 = vld [vmem:[%s1] ss:$2 sm:$0x3]
        %229 = vset.pattern.permute.xlu0 0
        %230 = vperm.xlu0 %229, %v226
        %v231 = vpop.permute.xlu0 %230
        %v234 = vperm.slane %v227, 0
        %v235 = vperm.slane %v227, 1
        %v238 = vsub.f32 %v231, %v234
        %v239 = vsub.f32 %v231, %v235
        %v240 = vmul.f32 %v238, %v238
        %v241 = vmul.f32 %v239, %v239
        %s242 = sld [smem:[#allocation2]]
        %v243 = vstv %s242
        %v244 = vmul.f32 %v240, %v243
        %v245 = vmul.f32 %v241, %v243
        %s246 = scalar_lea.vmem %s1, 1
        %v247 = vld [vmem:[%s246] ss:$2 sm:$0x3]
        %248 = vset.pattern.permute.xlu0 1
        %249 = vperm.xlu0 %248, %v226
        %v250 = vpop.permute.xlu0 %249
        %v253 = vperm.slane %v247, 0
        %v254 = vperm.slane %v247, 1
        %v257 = vsub.f32 %v250, %v253
        %v258 = vsub.f32 %v250, %v254
        %v259 = vmul.f32 %v257, %v257
        %v260 = vmul.f32 %v258, %v258
        %s261 = sld [smem:[#allocation2 + $0x1]]
        %v262 = vstv %s261
        %v263 = vmul.f32 %v259, %v262
        %v264 = vmul.f32 %v260, %v262
        %v265 = vadd.f32 %v244, %v263
        %v266 = vadd.f32 %v245, %v264
        %v267 = vmul.f32 %v265, 1.442695
        %v268 = vpow.pop %v267
        %v269 = vmul.f32 %v266, 1.442695
        %v270 = vpow.pop %v269
        %v271 = vld [vmem:[%s220] sm:$0xf]
        %vm272 = vcmask 64512
        %v274 = vsel %vm272, %v271, 0
        %276 = vmatpush.msra.mxu0 0.0
        %277 = vmatpush.msra.mxu0 0.0
        %278 = vmatpush.msra.mxu0 0.0
        %279 = vmatpush.msra.mxu0 0.0
        %280 = vmatpush.msra.mxu0 0.0
        %281 = vmatpush.msra.mxu0 0.0
        %282 = vmatpush.msra.mxu0 0.0
        %283 = vmatpush.msra.mxu0 0.0
        %284 = vmatpush.msra.mxu0 0.0
        %285 = vmatpush.msra.mxu0 0.0
        %286 = vmatpush.msra.mxu0 0.0
        %287 = vmatpush.msra.mxu0 0.0
        %288 = vmatpush.msra.mxu0 0.0
        %289 = vmatpush.msra.mxu0 0.0
        %290 = vmatpush.msra.mxu0 0.0
        %291 = vmatpush.msra.mxu0 %v268
        %292 = vmatmul.f32.gmra.mxu0 %v274
        %v293 = vpop.f32.mrf.mxu0
        %v294 = vadd.f32 0.0, %v293
        %295 = vdwg.mxu0
        %296 = vmatpush.msra.mxu0 0.0
        %297 = vmatpush.msra.mxu0 0.0
        %298 = vmatpush.msra.mxu0 0.0
        %299 = vmatpush.msra.mxu0 0.0
        %300 = vmatpush.msra.mxu0 0.0
        %301 = vmatpush.msra.mxu0 0.0
        %302 = vmatpush.msra.mxu0 0.0
        %303 = vmatpush.msra.mxu0 0.0
        %304 = vmatpush.msra.mxu0 0.0
        %305 = vmatpush.msra.mxu0 0.0
        %306 = vmatpush.msra.mxu0 0.0
        %307 = vmatpush.msra.mxu0 0.0
        %308 = vmatpush.msra.mxu0 0.0
        %309 = vmatpush.msra.mxu0 0.0
        %310 = vmatpush.msra.mxu0 0.0
        %311 = vmatpush.msra.mxu0 %v270
        %312 = vmatmul.f32.gmra.mxu0 %v274
        %v313 = vpop.f32.mrf.mxu0
        %v314 = vadd.f32 0.0, %v313
        %315 = vdwg.mxu0
        %v318 = vrot.slane %v314, 4
        %vm319 = vcmask 1043456
        %v320 = vsel %vm319, %v294, %v318
        %322 = vst [vmem:[%s225] sm:$0xff] %v320
        %p323 = scmp.lt.s32.totalorder %s16, 1
        %s324 = scalar_select %p323, %s16, 1
        %s325 = smul.addr %s324, 2
        %s326 = smul.addr %s325, 4
        %s327 = scalar_lea.vmem %s4, %s326
        // Predicated region
        $region41: #{setconv_grid_encoder_forward.1} parent=35 // pred_check
          %p328 = pneg %p128
        $region42: #{setconv_grid_encoder_forward.1} parent=35 // pred_check_branch
          %330 = sbr.rel (%p328) target = $region44
        $region43: #{setconv_grid_encoder_forward.1} parent=35 // pred_region
          _
        $region44: #{setconv_grid_encoder_forward.1} parent=35 // pred_fallthru
          _
      $region36: #{setconv_grid_encoder_forward.1} parent=5 // pred_fallthru
        _
      %p331 = scmp.le.s32.totalorder 2, %s11
      // Predicated region
      $region45: #{setconv_grid_encoder_forward.1} parent=5 // pred_check
        %p332 = pneg %p331
      $region46: #{setconv_grid_encoder_forward.1} parent=5 // pred_check_branch
        %334 = sbr.rel (%p332) target = $region48
      $region47: #{setconv_grid_encoder_forward.1} parent=5 // pred_region
        %s335 = ssub.s32 %s11, 2
        // Predicated region
        $region49: #{setconv_grid_encoder_forward.1} parent=47 // pred_check
          %p336 = pneg %p134
        $region50: #{setconv_grid_encoder_forward.1} parent=47 // pred_check_branch
          %338 = sbr.rel (%p336) target = $region52
        $region51: #{setconv_grid_encoder_forward.1} parent=47 // pred_region
          %p339 = scmp.lt.s32.totalorder %s17, 1
          %s340 = scalar_select %p339, %s17, 1
          %s341 = smul.addr %s340, 2
          %s342 = smul.addr %s341, 4
          %s343 = scalar_lea.vmem %s4, %s342
        $region52: #{setconv_grid_encoder_forward.1} parent=47 // pred_fallthru
          _
      $region48: #{setconv_grid_encoder_forward.1} parent=5 // pred_fallthru
        _
    $region6: #{setconv_grid_encoder_forward.1} parent=1 // loop_footer
      %s15 = sadd.s32 1, %s11
    $region7: #{setconv_grid_encoder_forward.1} parent=1 // loop_footer_branch
      %10 = sbr.rel target = $region3
    $region8: #{setconv_grid_encoder_forward.1} parent=1 // loop_exit
      _
    %344 = vsyncpa [#allocation3], 1
    %s345 = scalar_lea.sflag [#allocation3], 1
    %346 = vsyncpa %s345, 1

</llo_original>
